<compile_context>
chip_gen: v7x
topology: tpu7x:2x2x1
jax: 0.10.0
libtpu: 0.0.40
codegen_flags: <defaults>
</compile_context>

<pallas_src>
import math

import jax
import jax.numpy as jnp
from jax.experimental import pallas as pl
from jax.experimental.pallas import tpu as pltpu

# ---- model hyper-parameters (match ReluMLP defaults) ------------------------
MLP_LAYERS  = 2      # `mlp` argument: number of hidden Linear+LeakyReLU blocks
IN_NODE     = 3
HIDDEN_DIM  = 32
OUT_NODE    = 1
LRELU_SLOPE = 0.01

# ---- TPU-friendly padded dims (lane = 128) ----------------------------------
LANE    = 128
H_PAD   = LANE       # hidden width padded to one lane tile
OUT_PAD = LANE       # output width padded (only column 0 is real)

BATCH = 8            # small demo batch for __main__


def _leaky_relu(x, slope=LRELU_SLOPE):
    return jnp.where(x > 0, x, slope * x)


def relu_mlp_kernel(x_ref, w_in_ref, w_stack_ref, b_pack_ref, o_ref):
    """One (TB, IN_NODE) row-tile through the whole (padded) MLP.

    x_ref:       (TB, IN_NODE)            f32
    w_in_ref:    (IN_NODE, H_PAD)         f32  (first Linear weight)
    w_stack_ref: (MLP_LAYERS+1, H_PAD, H_PAD) bf16 (hidden layers + out layer)
    b_pack_ref:  (MLP_LAYERS+2, 1, H_PAD) f32  (b_in, b_hid..., b_out)
    o_ref:       (1, 1, TB)               f32  (lane-packed outputs)
    """
    x_blk = x_ref[...]                       # (TB, 3) f32
    w_in = w_in_ref[...]                     # (3, H_PAD) f32

    # --- input layer: K=3, do it as VPU broadcast mul-adds (no padded matmul)
    h32 = b_pack_ref[0]                      # (1, H_PAD) -> broadcasts over rows
    for j in range(IN_NODE):
        h32 = h32 + x_blk[:, j:j + 1] * w_in[j:j + 1, :]
    h = _leaky_relu(h32).astype(jnp.bfloat16)     # drop f32 copy early

    # --- hidden layers: static unroll, bf16 MXU dots, f32 epilogue
    for i in range(MLP_LAYERS):
        h32 = jnp.dot(h, w_stack_ref[i],
                      preferred_element_type=jnp.float32) + b_pack_ref[1 + i]
        h = _leaky_relu(h32).astype(jnp.bfloat16)

    # --- output layer: (TB, OUT_PAD) f32, only column 0 is real
    out = jnp.dot(h, w_stack_ref[MLP_LAYERS],
                  preferred_element_type=jnp.float32) + b_pack_ref[1 + MLP_LAYERS]

    # lane-pack: XLU transpose so the real column becomes a lane-dense row
    out_t = out.T                            # (OUT_PAD, TB); row 0 = real outputs
    o_ref[0] = out_t[0:1, :]                 # store (1, TB) lane-dense


def relu_mlp_forward(x, kparams, *, tb=None):
    """x: (B, IN_NODE) float32.  Returns (B, OUT_NODE) float32."""
    w_in, w_stack, b_pack = kparams
    b = x.shape[0]
    if tb is None:
        # >=2 grid steps per v7x core at moderate batch; bigger tiles amortize
        # the per-step overhead at large batch.
        tb = 512 if b >= 4096 else 128
    n_tiles = pl.cdiv(b, tb)
    b_pad = n_tiles * tb

    # batch-pad only (no feature padding); skipped entirely when b % tb == 0
    if b_pad == b:
        xp = x
    else:
        xp = jnp.zeros((b_pad, IN_NODE), jnp.float32).at[:b, :].set(x)

    flops = 2 * b_pad * (IN_NODE * H_PAD
                         + MLP_LAYERS * H_PAD * H_PAD
                         + H_PAD * OUT_PAD)
    bytes_accessed = (xp.size * 4 + w_in.size * 4 + w_stack.size * 2
                      + b_pack.size * 4 + b_pad * 4)

    out_pad = pl.pallas_call(
        relu_mlp_kernel,
        out_shape=jax.ShapeDtypeStruct((n_tiles, 1, tb), jnp.float32),
        grid_spec=pltpu.PrefetchScalarGridSpec(
            num_scalar_prefetch=0,
            grid=(n_tiles,),
            in_specs=[
                # activations: one row-tile per grid step (last dim = full dim)
                pl.BlockSpec((tb, IN_NODE), lambda i: (i, 0)),
                # constant-index specs -> VMEM-resident, DMA'd once
                pl.BlockSpec((IN_NODE, H_PAD), lambda i: (0, 0)),
                pl.BlockSpec((MLP_LAYERS + 1, H_PAD, H_PAD),
                             lambda i: (0, 0, 0)),
                pl.BlockSpec((MLP_LAYERS + 2, 1, H_PAD),
                             lambda i: (0, 0, 0)),
            ],
            out_specs=pl.BlockSpec((1, 1, tb), lambda i: (i, 0, 0)),
        ),
        compiler_params=pltpu.CompilerParams(
            dimension_semantics=("parallel",),       # v7x: both TCs share batch
            vmem_limit_bytes=32 * 1024 * 1024,
        ),
        cost_estimate=pl.CostEstimate(flops=flops, transcendentals=0,
                                      bytes_accessed=bytes_accessed),
    )(xp, w_in, w_stack, b_pack)

    # lane-packed (n_tiles, 1, tb) -> (B, 1)
    return out_pad.reshape(b_pad)[:b].reshape(b, OUT_NODE)


def init_params(key):
    """torch.nn.Linear-style U(-1/sqrt(fan_in), +) init, then pack for the kernel."""
    ks = jax.random.split(key, 2 * (MLP_LAYERS + 2))

    def lin(kw, kb, fan_in, fan_out):
        bound = 1.0 / math.sqrt(fan_in)
        w = jax.random.uniform(kw, (fan_in, fan_out), jnp.float32, -bound, bound)
        bv = jax.random.uniform(kb, (fan_out,), jnp.float32, -bound, bound)
        return w, bv

    w_in_f, b_in_f = lin(ks[0], ks[1], IN_NODE, HIDDEN_DIM)
    hid = [lin(ks[2 + 2 * i], ks[3 + 2 * i], HIDDEN_DIM, HIDDEN_DIM)
           for i in range(MLP_LAYERS)]
    w_out_f, b_out_f = lin(ks[2 + 2 * MLP_LAYERS], ks[3 + 2 * MLP_LAYERS],
                           HIDDEN_DIM, OUT_NODE)

    # zero-pad to lane-dense shapes (zeros are inert through Linear+LeakyReLU)
    def pad_w(w, rp, cp):
        return jnp.zeros((rp, cp), jnp.float32).at[:w.shape[0], :w.shape[1]].set(w)

    def pad_b(bv, cp):
        return jnp.zeros((1, cp), jnp.float32).at[0, :bv.shape[0]].set(bv)

    w_in = pad_w(w_in_f, IN_NODE, H_PAD)                          # f32 (3, 128)
    w_stack = jnp.stack([pad_w(w, H_PAD, H_PAD) for w, _ in hid]
                        + [pad_w(w_out_f, H_PAD, OUT_PAD)]
                        ).astype(jnp.bfloat16)                    # bf16 (3,128,128)
    b_pack = jnp.stack([pad_b(b_in_f, H_PAD)]
                       + [pad_b(bv, H_PAD) for _, bv in hid]
                       + [pad_b(b_out_f, OUT_PAD)])               # f32 (4,1,128)
    return w_in, w_stack, b_pack


def relu_mlp_reference(x, kparams):
    """Pure-JAX reference mirroring the kernel's f32/bf16 mixed precision."""
    w_in, w_stack, b_pack = kparams
    h = jnp.dot(x, w_in, preferred_element_type=jnp.float32) + b_pack[0]
    h = _leaky_relu(h).astype(jnp.bfloat16)
    for i in range(MLP_LAYERS):
        h = jnp.dot(h, w_stack[i],
                    preferred_element_type=jnp.float32) + b_pack[1 + i]
        h = _leaky_relu(h).astype(jnp.bfloat16)
    out = jnp.dot(h, w_stack[MLP_LAYERS],
                  preferred_element_type=jnp.float32) + b_pack[1 + MLP_LAYERS]
    return out[:, :OUT_NODE]


if __name__ == "__main__":
    key = jax.random.PRNGKey(0)
    k_x, k_p = jax.random.split(key)

    x = jax.random.normal(k_x, (BATCH, IN_NODE), jnp.float32)
    params = init_params(k_p)

    out = relu_mlp_forward(x, params)
    out = jax.block_until_ready(out)

    ref = relu_mlp_reference(x, params)
    assert out.shape == (BATCH, OUT_NODE)
    assert jnp.allclose(out, ref, atol=1e-2, rtol=1e-2), "mismatch vs reference"

    print("KERNEL_OK")
</pallas_src>

<mosaic_0001>
module attributes {stable_mosaic.version = 11 : i64} {
  func.func @relu_mlp_kernel(%arg0: i32, %arg1: memref<128x3xf32, #tpu.memory_space<vmem>>, %arg2: memref<3x128xf32, #tpu.memory_space<vmem>>, %arg3: memref<3x128x128xbf16, #tpu.memory_space<vmem>>, %arg4: memref<4x1x128xf32, #tpu.memory_space<vmem>>, %arg5: memref<1x1x128xf32, #tpu.memory_space<vmem>>) attributes {dimension_semantics = [#tpu.dimension_semantics<parallel>], iteration_bounds = array<i64: 1>, scalar_prefetch = 0 : i64, scratch_operands = 0 : i64, tpu.core_type = #tpu.core_type<tc>, window_params = [{transform_indices = @transform_0, window_bounds = array<i64: 128, 3>}, {pipeline_mode = #tpu.pipeline_mode<synchronous>, transform_indices = @transform_1, window_bounds = array<i64: 3, 128>}, {pipeline_mode = #tpu.pipeline_mode<synchronous>, transform_indices = @transform_2, window_bounds = array<i64: 3, 128, 128>}, {pipeline_mode = #tpu.pipeline_mode<synchronous>, transform_indices = @transform_3, window_bounds = array<i64: 4, 1, 128>}, {transform_indices = @transform_4, window_bounds = array<i64: 1, 1, 128>}]} {
    %c0 = arith.constant 0 : index
    %c0_0 = arith.constant 0 : index
    %0 = vector.load %arg1[%c0, %c0_0] : memref<128x3xf32, #tpu.memory_space<vmem>>, vector<128x3xf32>
    %c0_1 = arith.constant 0 : index
    %c0_2 = arith.constant 0 : index
    %1 = vector.load %arg2[%c0_1, %c0_2] : memref<3x128xf32, #tpu.memory_space<vmem>>, vector<3x128xf32>
    %c0_3 = arith.constant 0 : index
    %c0_4 = arith.constant 0 : index
    %c0_5 = arith.constant 0 : index
    %2 = vector.load %arg4[%c0_3, %c0_4, %c0_5] : memref<4x1x128xf32, #tpu.memory_space<vmem>>, vector<1x1x128xf32>
    %3 = vector.shape_cast %2 : vector<1x1x128xf32> to vector<1x128xf32>
    %4 = vector.extract_strided_slice %0 {offsets = [0, 0], sizes = [128, 1], strides = [1, 1]} : vector<128x3xf32> to vector<128x1xf32>
    %5 = vector.extract_strided_slice %1 {offsets = [0, 0], sizes = [1, 128], strides = [1, 1]} : vector<3x128xf32> to vector<1x128xf32>
    %6 = vector.broadcast %4 : vector<128x1xf32> to vector<128x128xf32>
    %7 = vector.broadcast %5 : vector<1x128xf32> to vector<128x128xf32>
    %8 = arith.mulf %6, %7 : vector<128x128xf32>
    %9 = vector.broadcast %3 : vector<1x128xf32> to vector<128x128xf32>
    %10 = arith.addf %9, %8 : vector<128x128xf32>
    %11 = vector.extract_strided_slice %0 {offsets = [0, 1], sizes = [128, 1], strides = [1, 1]} : vector<128x3xf32> to vector<128x1xf32>
    %12 = vector.extract_strided_slice %1 {offsets = [1, 0], sizes = [1, 128], strides = [1, 1]} : vector<3x128xf32> to vector<1x128xf32>
    %13 = vector.broadcast %11 : vector<128x1xf32> to vector<128x128xf32>
    %14 = vector.broadcast %12 : vector<1x128xf32> to vector<128x128xf32>
    %15 = arith.mulf %13, %14 : vector<128x128xf32>
    %16 = arith.addf %10, %15 : vector<128x128xf32>
    %17 = vector.extract_strided_slice %0 {offsets = [0, 2], sizes = [128, 1], strides = [1, 1]} : vector<128x3xf32> to vector<128x1xf32>
    %18 = vector.extract_strided_slice %1 {offsets = [2, 0], sizes = [1, 128], strides = [1, 1]} : vector<3x128xf32> to vector<1x128xf32>
    %19 = vector.broadcast %17 : vector<128x1xf32> to vector<128x128xf32>
    %20 = vector.broadcast %18 : vector<1x128xf32> to vector<128x128xf32>
    %21 = arith.mulf %19, %20 : vector<128x128xf32>
    %22 = arith.addf %16, %21 : vector<128x128xf32>
    %cst = arith.constant 0.000000e+00 : f32
    %23 = vector.broadcast %cst : f32 to vector<128x128xf32>
    %24 = arith.cmpf ogt, %22, %23 : vector<128x128xf32>
    %cst_6 = arith.constant 0.00999999977 : f32
    %25 = vector.broadcast %cst_6 : f32 to vector<128x128xf32>
    %26 = arith.mulf %25, %22 : vector<128x128xf32>
    %27 = arith.select %24, %22, %26 : vector<128x128xi1>, vector<128x128xf32>
    %28 = arith.truncf %27 : vector<128x128xf32> to vector<128x128xbf16>
    %c0_7 = arith.constant 0 : index
    %c0_8 = arith.constant 0 : index
    %c0_9 = arith.constant 0 : index
    %29 = vector.load %arg3[%c0_7, %c0_8, %c0_9] : memref<3x128x128xbf16, #tpu.memory_space<vmem>>, vector<1x128x128xbf16>
    %30 = vector.shape_cast %29 : vector<1x128x128xbf16> to vector<128x128xbf16>
    %cst_10 = arith.constant dense<0.000000e+00> : vector<128x128xf32>
    %31 = tpu.matmul %28, %30, %cst_10 {dimension_numbers = #tpu.dot_dimension_numbers<[1], [0], [0], [1], [0, 0, 1, 1], [], []>} : vector<128x128xbf16>, vector<128x128xbf16>, vector<128x128xf32> -> vector<128x128xf32>
    %c1 = arith.constant 1 : index
    %c0_11 = arith.constant 0 : index
    %c0_12 = arith.constant 0 : index
    %32 = vector.load %arg4[%c1, %c0_11, %c0_12] : memref<4x1x128xf32, #tpu.memory_space<vmem>>, vector<1x1x128xf32>
    %33 = vector.shape_cast %32 : vector<1x1x128xf32> to vector<1x128xf32>
    %34 = vector.broadcast %33 : vector<1x128xf32> to vector<128x128xf32>
    %35 = arith.addf %31, %34 : vector<128x128xf32>
    %cst_13 = arith.constant 0.000000e+00 : f32
    %36 = vector.broadcast %cst_13 : f32 to vector<128x128xf32>
    %37 = arith.cmpf ogt, %35, %36 : vector<128x128xf32>
    %cst_14 = arith.constant 0.00999999977 : f32
    %38 = vector.broadcast %cst_14 : f32 to vector<128x128xf32>
    %39 = arith.mulf %38, %35 : vector<128x128xf32>
    %40 = arith.select %37, %35, %39 : vector<128x128xi1>, vector<128x128xf32>
    %41 = arith.truncf %40 : vector<128x128xf32> to vector<128x128xbf16>
    %c1_15 = arith.constant 1 : index
    %c0_16 = arith.constant 0 : index
    %c0_17 = arith.constant 0 : index
    %42 = vector.load %arg3[%c1_15, %c0_16, %c0_17] : memref<3x128x128xbf16, #tpu.memory_space<vmem>>, vector<1x128x128xbf16>
    %43 = vector.shape_cast %42 : vector<1x128x128xbf16> to vector<128x128xbf16>
    %cst_18 = arith.constant dense<0.000000e+00> : vector<128x128xf32>
    %44 = tpu.matmul %41, %43, %cst_18 {dimension_numbers = #tpu.dot_dimension_numbers<[1], [0], [0], [1], [0, 0, 1, 1], [], []>} : vector<128x128xbf16>, vector<128x128xbf16>, vector<128x128xf32> -> vector<128x128xf32>
    %c2 = arith.constant 2 : index
    %c0_19 = arith.constant 0 : index
    %c0_20 = arith.constant 0 : index
    %45 = vector.load %arg4[%c2, %c0_19, %c0_20] : memref<4x1x128xf32, #tpu.memory_space<vmem>>, vector<1x1x128xf32>
    %46 = vector.shape_cast %45 : vector<1x1x128xf32> to vector<1x128xf32>
    %47 = vector.broadcast %46 : vector<1x128xf32> to vector<128x128xf32>
    %48 = arith.addf %44, %47 : vector<128x128xf32>
    %cst_21 = arith.constant 0.000000e+00 : f32
    %49 = vector.broadcast %cst_21 : f32 to vector<128x128xf32>
    %50 = arith.cmpf ogt, %48, %49 : vector<128x128xf32>
    %cst_22 = arith.constant 0.00999999977 : f32
    %51 = vector.broadcast %cst_22 : f32 to vector<128x128xf32>
    %52 = arith.mulf %51, %48 : vector<128x128xf32>
    %53 = arith.select %50, %48, %52 : vector<128x128xi1>, vector<128x128xf32>
    %54 = arith.truncf %53 : vector<128x128xf32> to vector<128x128xbf16>
    %c2_23 = arith.constant 2 : index
    %c0_24 = arith.constant 0 : index
    %c0_25 = arith.constant 0 : index
    %55 = vector.load %arg3[%c2_23, %c0_24, %c0_25] : memref<3x128x128xbf16, #tpu.memory_space<vmem>>, vector<1x128x128xbf16>
    %56 = vector.shape_cast %55 : vector<1x128x128xbf16> to vector<128x128xbf16>
    %cst_26 = arith.constant dense<0.000000e+00> : vector<128x128xf32>
    %57 = tpu.matmul %54, %56, %cst_26 {dimension_numbers = #tpu.dot_dimension_numbers<[1], [0], [0], [1], [0, 0, 1, 1], [], []>} : vector<128x128xbf16>, vector<128x128xbf16>, vector<128x128xf32> -> vector<128x128xf32>
    %c3 = arith.constant 3 : index
    %c0_27 = arith.constant 0 : index
    %c0_28 = arith.constant 0 : index
    %58 = vector.load %arg4[%c3, %c0_27, %c0_28] : memref<4x1x128xf32, #tpu.memory_space<vmem>>, vector<1x1x128xf32>
    %59 = vector.shape_cast %58 : vector<1x1x128xf32> to vector<1x128xf32>
    %60 = vector.broadcast %59 : vector<1x128xf32> to vector<128x128xf32>
    %61 = arith.addf %57, %60 : vector<128x128xf32>
    %62 = tpu.transpose %61, [1, 0] : vector<128x128xf32> -> vector<128x128xf32>
    %63 = vector.extract_strided_slice %62 {offsets = [0, 0], sizes = [1, 128], strides = [1, 1]} : vector<128x128xf32> to vector<1x128xf32>
    %c0_29 = arith.constant 0 : index
    %c0_30 = arith.constant 0 : index
    %c0_31 = arith.constant 0 : index
    %64 = vector.load %arg5[%c0_29, %c0_30, %c0_31] : memref<1x1x128xf32, #tpu.memory_space<vmem>>, vector<1x1x128xf32>
    %65 = vector.shape_cast %64 : vector<1x1x128xf32> to vector<1x128xf32>
    %66 = vector.shape_cast %63 : vector<1x128xf32> to vector<1x1x128xf32>
    tpu.vector_store %arg5[%c0_29, %c0_30, %c0_31], %66 {strides = array<i32>} : memref<1x1x128xf32, #tpu.memory_space<vmem>>, vector<1x1x128xf32>,
    return
  }
  func.func @transform_0(%arg0: i32) -> (i32, i32) {
    %c0_i32 = arith.constant 0 : i32
    %c0_i32_0 = arith.constant 0 : i32
    return %arg0, %c0_i32 : i32, i32
  }
  func.func @transform_1(%arg0: i32) -> (i32, i32) {
    %c0_i32 = arith.constant 0 : i32
    %c0_i32_0 = arith.constant 0 : i32
    %c0_i32_1 = arith.constant 0 : i32
    return %c0_i32, %c0_i32_0 : i32, i32
  }
  func.func @transform_2(%arg0: i32) -> (i32, i32, i32) {
    %c0_i32 = arith.constant 0 : i32
    %c0_i32_0 = arith.constant 0 : i32
    %c0_i32_1 = arith.constant 0 : i32
    %c0_i32_2 = arith.constant 0 : i32
    return %c0_i32, %c0_i32_0, %c0_i32_1 : i32, i32, i32
  }
  func.func @transform_3(%arg0: i32) -> (i32, i32, i32) {
    %c0_i32 = arith.constant 0 : i32
    %c0_i32_0 = arith.constant 0 : i32
    %c0_i32_1 = arith.constant 0 : i32
    %c0_i32_2 = arith.constant 0 : i32
    return %c0_i32, %c0_i32_0, %c0_i32_1 : i32, i32, i32
  }
  func.func @transform_4(%arg0: i32) -> (i32, i32, i32) {
    %c0_i32 = arith.constant 0 : i32
    %c0_i32_0 = arith.constant 0 : i32
    %c0_i32_1 = arith.constant 0 : i32
    return %arg0, %c0_i32, %c0_i32_0 : i32, i32, i32
  }
}

</mosaic_0001>

<llo_original>
// kernel: tpu_custom_call.1
$region0: #{tpu_custom_call.1}
  #allocation0 [shape = 'u32[]', space=smem, size = 0x4, offset = 0x4, fixed_abs, tag = 'smem constant byte address 0x4 - core index']
  #allocation1 [shape = 'u32[144,128]{1,0:T(1,128)}', space=vmem, size = 0x12000, scoped, tag = 'internal scratch']
  %s0 = inlined_call_operand.vmem [shape: f32[128,3], index: 0, kind: input, shape index: {}]
  %s1 = inlined_call_operand.vmem [shape: f32[3,128], index: 1, kind: input, shape index: {}]
  %s2 = inlined_call_operand.hbm [shape: bf16[3,128,128], index: 2, kind: input, shape index: {}]
  %s3 = inlined_call_operand.vmem [shape: f32[4,1,128], index: 3, kind: input, shape index: {}]
  %s4 = inlined_call_operand.hbm [shape: f32[1,1,128], index: 4, kind: output, shape index: {}]
  %s5 = sld [smem:[#allocation0]]
  $region30: #{tpu_custom_call.1} parent=0
    _
  %s7 = ssub.s32 1, %s5
  %s8 = scalar_select 0, %s7, %s5
  $region1: #{tpu_custom_call.1} parent=0
    #allocation2 [shape = 'u8[98304]{0}', space=vmem, size = 0x18000, scoped, tag = 'input window, operand 2, single buffered']
    #allocation3 [shape = 's32[1]{0}', space=sflag, size = 0x4, scoped, tag = 'scoped memory for tpu_custom_call.1']
    #allocation4 [shape = 's32[1]{0}', space=sflag, size = 0x4, scoped, tag = 'scoped memory for tpu_custom_call.1']
    #allocation5 [shape = 'u8[512]{0}', space=vmem, size = 0x400, scoped, tag = 'output window, operand 0, single buffered']
    %9 = vsyncpa [#allocation3], 0
    %10 = vsyncpa [#allocation4], 0
    // Predicated region
    $region2: #{tpu_custom_call.1} parent=1 // pred_check
      _
    $region3: #{tpu_custom_call.1} parent=1 // pred_check_branch
      %12 = sbr.rel (0) target = $region5
    $region4: #{tpu_custom_call.1} parent=1 // pred_region
      _
    $region5: #{tpu_custom_call.1} parent=1 // pred_fallthru
      _
    // Predicated region
    $region6: #{tpu_custom_call.1} parent=1 // pred_check
      _
    $region7: #{tpu_custom_call.1} parent=1 // pred_check_branch
      %14 = sbr.rel (0) target = $region9
    $region8: #{tpu_custom_call.1} parent=1 // pred_region
      _
    $region9: #{tpu_custom_call.1} parent=1 // pred_fallthru
      _
    // Predicated region
    $region10: #{tpu_custom_call.1} parent=1 // pred_check
      _
    $region11: #{tpu_custom_call.1} parent=1 // pred_check_branch
      %16 = sbr.rel (0) target = $region13
    $region12: #{tpu_custom_call.1} parent=1 // pred_region
      %s18 = ssub.s32 3072, 3072
      %19 = vsyncadd [#allocation3], %s18
      %s20 = sshll.u32 [#allocation2], 4
      %s21 = int_to_ptr.vmem [resolvable:$true] %s20
      %26 = dma.hbm_to_vmem [thread:$0]  %s2, 3072, %s21, [#allocation3], 64, 64, 4
    $region13: #{tpu_custom_call.1} parent=1 // pred_fallthru
      _
    // Predicated region
    $region14: #{tpu_custom_call.1} parent=1 // pred_check
      _
    $region15: #{tpu_custom_call.1} parent=1 // pred_check_branch
      %28 = sbr.rel (0) target = $region17
    $region16: #{tpu_custom_call.1} parent=1 // pred_region
      _
    $region17: #{tpu_custom_call.1} parent=1 // pred_fallthru
      _
    // Predicated region
    $region18: #{tpu_custom_call.1} parent=1 // pred_check
      _
    $region19: #{tpu_custom_call.1} parent=1 // pred_check_branch
      %30 = sbr.rel (0) target = $region21
    $region20: #{tpu_custom_call.1} parent=1 // pred_region
      %31 = dma.done [#allocation3], 3072
    $region21: #{tpu_custom_call.1} parent=1 // pred_fallthru
      _
    %v33 = vld [vmem:[%s0] sm:$0xff]
    %v34 = vld [vmem:[%s0 + $0x8] sm:$0xff]
    %v35 = vld [vmem:[%s0 + $0x10] sm:$0xff]
    %v36 = vld [vmem:[%s0 + $0x18] sm:$0xff]
    %v37 = vld [vmem:[%s0 + $0x20] sm:$0xff]
    %v38 = vld [vmem:[%s0 + $0x28] sm:$0xff]
    %v39 = vld [vmem:[%s0 + $0x30] sm:$0xff]
    %v40 = vld [vmem:[%s0 + $0x38] sm:$0xff]
    %v41 = vld [vmem:[%s0 + $0x40] sm:$0xff]
    %v42 = vld [vmem:[%s0 + $0x48] sm:$0xff]
    %v43 = vld [vmem:[%s0 + $0x50] sm:$0xff]
    %v44 = vld [vmem:[%s0 + $0x58] sm:$0xff]
    %v45 = vld [vmem:[%s0 + $0x60] sm:$0xff]
    %v46 = vld [vmem:[%s0 + $0x68] sm:$0xff]
    %v47 = vld [vmem:[%s0 + $0x70] sm:$0xff]
    %v48 = vld [vmem:[%s0 + $0x78] sm:$0xff]
    %v49 = vld [vmem:[%s1] sm:$0x7]
    %v50 = vld [vmem:[%s3] sm:$0x1]
    %52 = vset.pattern.permute.xlu0 0
    %53 = vperm.xlu0 %52, %v33
    %v54 = vpop.permute.xlu0 %53
    %57 = vset.pattern.permute.xlu0 0
    %58 = vperm.xlu0 %57, %v34
    %v59 = vpop.permute.xlu0 %58
    %62 = vset.pattern.permute.xlu0 0
    %63 = vperm.xlu0 %62, %v35
    %v64 = vpop.permute.xlu0 %63
    %67 = vset.pattern.permute.xlu0 0
    %68 = vperm.xlu0 %67, %v36
    %v69 = vpop.permute.xlu0 %68
    %72 = vset.pattern.permute.xlu0 0
    %73 = vperm.xlu0 %72, %v37
    %v74 = vpop.permute.xlu0 %73
    %77 = vset.pattern.permute.xlu0 0
    %78 = vperm.xlu0 %77, %v38
    %v79 = vpop.permute.xlu0 %78
    %82 = vset.pattern.permute.xlu0 0
    %83 = vperm.xlu0 %82, %v39
    %v84 = vpop.permute.xlu0 %83
    %87 = vset.pattern.permute.xlu0 0
    %88 = vperm.xlu0 %87, %v40
    %v89 = vpop.permute.xlu0 %88
    %92 = vset.pattern.permute.xlu0 0
    %93 = vperm.xlu0 %92, %v41
    %v94 = vpop.permute.xlu0 %93
    %97 = vset.pattern.permute.xlu0 0
    %98 = vperm.xlu0 %97, %v42
    %v99 = vpop.permute.xlu0 %98
    %102 = vset.pattern.permute.xlu0 0
    %103 = vperm.xlu0 %102, %v43
    %v104 = vpop.permute.xlu0 %103
    %107 = vset.pattern.permute.xlu0 0
    %108 = vperm.xlu0 %107, %v44
    %v109 = vpop.permute.xlu0 %108
    %112 = vset.pattern.permute.xlu0 0
    %113 = vperm.xlu0 %112, %v45
    %v114 = vpop.permute.xlu0 %113
    %117 = vset.pattern.permute.xlu0 0
    %118 = vperm.xlu0 %117, %v46
    %v119 = vpop.permute.xlu0 %118
    %122 = vset.pattern.permute.xlu0 0
    %123 = vperm.xlu0 %122, %v47
    %v124 = vpop.permute.xlu0 %123
    %127 = vset.pattern.permute.xlu0 0
    %128 = vperm.xlu0 %127, %v48
    %v129 = vpop.permute.xlu0 %128
    %v131 = vlaneseq
    %v132 = vshrl.u32 %v131, 7
    %v133 = vsub.s32 0, %v132
    %v134 = vrot.slane %v49, %v133
    %v135 = vmul.f32 %v54, %v134
    %v136 = vmul.f32 %v59, %v134
    %v137 = vmul.f32 %v64, %v134
    %v138 = vmul.f32 %v69, %v134
    %v139 = vmul.f32 %v74, %v134
    %v140 = vmul.f32 %v79, %v134
    %v141 = vmul.f32 %v84, %v134
    %v142 = vmul.f32 %v89, %v134
    %v143 = vmul.f32 %v94, %v134
    %v144 = vmul.f32 %v99, %v134
    %v145 = vmul.f32 %v104, %v134
    %v146 = vmul.f32 %v109, %v134
    %v147 = vmul.f32 %v114, %v134
    %v148 = vmul.f32 %v119, %v134
    %v149 = vmul.f32 %v124, %v134
    %v150 = vmul.f32 %v129, %v134
    %v152 = vlaneseq
    %v153 = vshrl.u32 %v152, 7
    %v154 = vsub.s32 0, %v153
    %v155 = vrot.slane %v50, %v154
    %v157 = vadd.f32 %v155, %v135
    %v158 = vadd.f32 %v155, %v136
    %v159 = vadd.f32 %v155, %v137
    %v160 = vadd.f32 %v155, %v138
    %v161 = vadd.f32 %v155, %v139
    %v162 = vadd.f32 %v155, %v140
    %v163 = vadd.f32 %v155, %v141
    %v164 = vadd.f32 %v155, %v142
    %v165 = vadd.f32 %v155, %v143
    %v166 = vadd.f32 %v155, %v144
    %v167 = vadd.f32 %v155, %v145
    %v168 = vadd.f32 %v155, %v146
    %v169 = vadd.f32 %v155, %v147
    %v170 = vadd.f32 %v155, %v148
    %v171 = vadd.f32 %v155, %v149
    %v172 = vadd.f32 %v155, %v150
    %173 = vset.pattern.permute.xlu0 1
    %174 = vperm.xlu0 %173, %v33
    %v175 = vpop.permute.xlu0 %174
    %177 = vset.pattern.permute.xlu0 1
    %178 = vperm.xlu0 %177, %v34
    %v179 = vpop.permute.xlu0 %178
    %181 = vset.pattern.permute.xlu0 1
    %182 = vperm.xlu0 %181, %v35
    %v183 = vpop.permute.xlu0 %182
    %185 = vset.pattern.permute.xlu0 1
    %186 = vperm.xlu0 %185, %v36
    %v187 = vpop.permute.xlu0 %186
    %189 = vset.pattern.permute.xlu0 1
    %190 = vperm.xlu0 %189, %v37
    %v191 = vpop.permute.xlu0 %190
    %193 = vset.pattern.permute.xlu0 1
    %194 = vperm.xlu0 %193, %v38
    %v195 = vpop.permute.xlu0 %194
    %197 = vset.pattern.permute.xlu0 1
    %198 = vperm.xlu0 %197, %v39
    %v199 = vpop.permute.xlu0 %198
    %201 = vset.pattern.permute.xlu0 1
    %202 = vperm.xlu0 %201, %v40
    %v203 = vpop.permute.xlu0 %202
    %205 = vset.pattern.permute.xlu0 1
    %206 = vperm.xlu0 %205, %v41
    %v207 = vpop.permute.xlu0 %206
    %209 = vset.pattern.permute.xlu0 1
    %210 = vperm.xlu0 %209, %v42
    %v211 = vpop.permute.xlu0 %210
    %213 = vset.pattern.permute.xlu0 1
    %214 = vperm.xlu0 %213, %v43
    %v215 = vpop.permute.xlu0 %214
    %217 = vset.pattern.permute.xlu0 1
    %218 = vperm.xlu0 %217, %v44
    %v219 = vpop.permute.xlu0 %218
    %221 = vset.pattern.permute.xlu0 1
    %222 = vperm.xlu0 %221, %v45
    %v223 = vpop.permute.xlu0 %222
    %225 = vset.pattern.permute.xlu0 1
    %226 = vperm.xlu0 %225, %v46
    %v227 = vpop.permute.xlu0 %226
    %229 = vset.pattern.permute.xlu0 1
    %230 = vperm.xlu0 %229, %v47
    %v231 = vpop.permute.xlu0 %230
    %233 = vset.pattern.permute.xlu0 1
    %234 = vperm.xlu0 %233, %v48
    %v235 = vpop.permute.xlu0 %234
    %v237 = vlaneseq
    %v238 = vshrl.u32 %v237, 7
    %v239 = vsub.s32 1, %v238
    %v240 = vrot.slane %v49, %v239
    %v241 = vmul.f32 %v175, %v240
    %v242 = vmul.f32 %v179, %v240
    %v243 = vmul.f32 %v183, %v240
    %v244 = vmul.f32 %v187, %v240
    %v245 = vmul.f32 %v191, %v240
    %v246 = vmul.f32 %v195, %v240
    %v247 = vmul.f32 %v199, %v240
    %v248 = vmul.f32 %v203, %v240
    %v249 = vmul.f32 %v207, %v240
    %v250 = vmul.f32 %v211, %v240
    %v251 = vmul.f32 %v215, %v240
    %v252 = vmul.f32 %v219, %v240
    %v253 = vmul.f32 %v223, %v240
    %v254 = vmul.f32 %v227, %v240
    %v255 = vmul.f32 %v231, %v240
    %v256 = vmul.f32 %v235, %v240
    %v257 = vadd.f32 %v157, %v241
    %v258 = vadd.f32 %v158, %v242
    %v259 = vadd.f32 %v159, %v243
    %v260 = vadd.f32 %v160, %v244
    %v261 = vadd.f32 %v161, %v245
    %v262 = vadd.f32 %v162, %v246
    %v263 = vadd.f32 %v163, %v247
    %v264 = vadd.f32 %v164, %v248
    %v265 = vadd.f32 %v165, %v249
    %v266 = vadd.f32 %v166, %v250
    %v267 = vadd.f32 %v167, %v251
    %v268 = vadd.f32 %v168, %v252
    %v269 = vadd.f32 %v169, %v253
    %v270 = vadd.f32 %v170, %v254
    %v271 = vadd.f32 %v171, %v255
    %v272 = vadd.f32 %v172, %v256
    %273 = vset.pattern.permute.xlu0 2
    %274 = vperm.xlu0 %273, %v33
    %v275 = vpop.permute.xlu0 %274
    %277 = vset.pattern.permute.xlu0 2
    %278 = vperm.xlu0 %277, %v34
    %v279 = vpop.permute.xlu0 %278
    %281 = vset.pattern.permute.xlu0 2
    %282 = vperm.xlu0 %281, %v35
    %v283 = vpop.permute.xlu0 %282
    %285 = vset.pattern.permute.xlu0 2
    %286 = vperm.xlu0 %285, %v36
    %v287 = vpop.permute.xlu0 %286
    %289 = vset.pattern.permute.xlu0 2
    %290 = vperm.xlu0 %289, %v37
    %v291 = vpop.permute.xlu0 %290
    %293 = vset.pattern.permute.xlu0 2
    %294 = vperm.xlu0 %293, %v38
    %v295 = vpop.permute.xlu0 %294
    %297 = vset.pattern.permute.xlu0 2
    %298 = vperm.xlu0 %297, %v39
    %v299 = vpop.permute.xlu0 %298
    %301 = vset.pattern.permute.xlu0 2
    %302 = vperm.xlu0 %301, %v40
    %v303 = vpop.permute.xlu0 %302
    %305 = vset.pattern.permute.xlu0 2
    %306 = vperm.xlu0 %305, %v41
    %v307 = vpop.permute.xlu0 %306
    %309 = vset.pattern.permute.xlu0 2
    %310 = vperm.xlu0 %309, %v42
    %v311 = vpop.permute.xlu0 %310
    %313 = vset.pattern.permute.xlu0 2
    %314 = vperm.xlu0 %313, %v43
    %v315 = vpop.permute.xlu0 %314
    %317 = vset.pattern.permute.xlu0 2
    %318 = vperm.xlu0 %317, %v44
    %v319 = vpop.permute.xlu0 %318
    %321 = vset.pattern.permute.xlu0 2
    %322 = vperm.xlu0 %321, %v45
    %v323 = vpop.permute.xlu0 %322
    %325 = vset.pattern.permute.xlu0 2
    %326 = vperm.xlu0 %325, %v46
    %v327 = vpop.permute.xlu0 %326
    %329 = vset.pattern.permute.xlu0 2
    %330 = vperm.xlu0 %329, %v47
    %v331 = vpop.permute.xlu0 %330
    %333 = vset.pattern.permute.xlu0 2
    %334 = vperm.xlu0 %333, %v48
    %v335 = vpop.permute.xlu0 %334
    %v337 = vlaneseq
    %v338 = vshrl.u32 %v337, 7
    %v339 = vsub.s32 2, %v338
    %v340 = vrot.slane %v49, %v339
    %v341 = vmul.f32 %v275, %v340
    %v342 = vmul.f32 %v279, %v340
    %v343 = vmul.f32 %v283, %v340
    %v344 = vmul.f32 %v287, %v340
    %v345 = vmul.f32 %v291, %v340
    %v346 = vmul.f32 %v295, %v340
    %v347 = vmul.f32 %v299, %v340
    %v348 = vmul.f32 %v303, %v340
    %v349 = vmul.f32 %v307, %v340
    %v350 = vmul.f32 %v311, %v340
    %v351 = vmul.f32 %v315, %v340
    %v352 = vmul.f32 %v319, %v340
    %v353 = vmul.f32 %v323, %v340
    %v354 = vmul.f32 %v327, %v340
    %v355 = vmul.f32 %v331, %v340
    %v356 = vmul.f32 %v335, %v340
    %v357 = vadd.f32 %v257, %v341
    %v358 = vadd.f32 %v258, %v342
    %v359 = vadd.f32 %v259, %v343
    %v360 = vadd.f32 %v260, %v344
    %v361 = vadd.f32 %v261, %v345
    %v362 = vadd.f32 %v262, %v346
    %v363 = vadd.f32 %v263, %v347
    %v364 = vadd.f32 %v264, %v348
    %v365 = vadd.f32 %v265, %v349
    %v366 = vadd.f32 %v266, %v350
    %v367 = vadd.f32 %v267, %v351
    %v368 = vadd.f32 %v268, %v352
    %v369 = vadd.f32 %v269, %v353
    %v370 = vadd.f32 %v270, %v354
    %v371 = vadd.f32 %v271, %v355
    %v372 = vadd.f32 %v272, %v356
    %vm373 = vcmp.gt.f32.partialorder %v357, 0.0
    %vm374 = vcmp.gt.f32.partialorder %v358, 0.0
    %vm375 = vcmp.gt.f32.partialorder %v359, 0.0
    %vm376 = vcmp.gt.f32.partialorder %v360, 0.0
    %vm377 = vcmp.gt.f32.partialorder %v361, 0.0
    %vm378 = vcmp.gt.f32.partialorder %v362, 0.0
    %vm379 = vcmp.gt.f32.partialorder %v363, 0.0
    %vm380 = vcmp.gt.f32.partialorder %v364, 0.0
    %vm381 = vcmp.gt.f32.partialorder %v365, 0.0
    %vm382 = vcmp.gt.f32.partialorder %v366, 0.0
    %vm383 = vcmp.gt.f32.partialorder %v367, 0.0
    %vm384 = vcmp.gt.f32.partialorder %v368, 0.0
    %vm385 = vcmp.gt.f32.partialorder %v369, 0.0
    %vm386 = vcmp.gt.f32.partialorder %v370, 0.0
    %vm387 = vcmp.gt.f32.partialorder %v371, 0.0
    %vm388 = vcmp.gt.f32.partialorder %v372, 0.0
    %v389 = vmul.f32 %v357, 0.01
    %v390 = vmul.f32 %v358, 0.01
    %v391 = vmul.f32 %v359, 0.01
    %v392 = vmul.f32 %v360, 0.01
    %v393 = vmul.f32 %v361, 0.01
    %v394 = vmul.f32 %v362, 0.01
    %v395 = vmul.f32 %v363, 0.01
    %v396 = vmul.f32 %v364, 0.01
    %v397 = vmul.f32 %v365, 0.01
    %v398 = vmul.f32 %v366, 0.01
    %v399 = vmul.f32 %v367, 0.01
    %v400 = vmul.f32 %v368, 0.01
    %v401 = vmul.f32 %v369, 0.01
    %v402 = vmul.f32 %v370, 0.01
    %v403 = vmul.f32 %v371, 0.01
    %v404 = vmul.f32 %v372, 0.01
    %v405 = vsel %vm373, %v357, %v389
    %v406 = vsel %vm374, %v358, %v390
    %v407 = vsel %vm375, %v359, %v391
    %v408 = vsel %vm376, %v360, %v392
    %v409 = vsel %vm377, %v361, %v393
    %v410 = vsel %vm378, %v362, %v394
    %v411 = vsel %vm379, %v363, %v395
    %v412 = vsel %vm380, %v364, %v396
    %v413 = vsel %vm381, %v365, %v397
    %v414 = vsel %vm382, %v366, %v398
    %v415 = vsel %vm383, %v367, %v399
    %v416 = vsel %vm384, %v368, %v400
    %v417 = vsel %vm385, %v369, %v401
    %v418 = vsel %vm386, %v370, %v402
    %v419 = vsel %vm387, %v371, %v403
    %v420 = vsel %vm388, %v372, %v404
    %v421 = vpack.c.bf16 %v406, %v405
    %v422 = vpack.c.bf16 %v408, %v407
    %v423 = vpack.c.bf16 %v410, %v409
    %v424 = vpack.c.bf16 %v412, %v411
    %v425 = vpack.c.bf16 %v414, %v413
    %v426 = vpack.c.bf16 %v416, %v415
    %v427 = vpack.c.bf16 %v418, %v417
    %v428 = vpack.c.bf16 %v420, %v419
    %v429 = vld [vmem:[#allocation2] sm:$0xf]
    %v430 = vld [vmem:[#allocation2 + $0x4] sm:$0xf]
    %v431 = vld [vmem:[#allocation2 + $0x8] sm:$0xf]
    %v432 = vld [vmem:[#allocation2 + $0xc] sm:$0xf]
    %v433 = vld [vmem:[#allocation2 + $0x10] sm:$0xf]
    %v434 = vld [vmem:[#allocation2 + $0x14] sm:$0xf]
    %v435 = vld [vmem:[#allocation2 + $0x18] sm:$0xf]
    %v436 = vld [vmem:[#allocation2 + $0x1c] sm:$0xf]
    %v437 = vld [vmem:[#allocation2 + $0x20] sm:$0xf]
    %v438 = vld [vmem:[#allocation2 + $0x24] sm:$0xf]
    %v439 = vld [vmem:[#allocation2 + $0x28] sm:$0xf]
    %v440 = vld [vmem:[#allocation2 + $0x2c] sm:$0xf]
    %v441 = vld [vmem:[#allocation2 + $0x30] sm:$0xf]
    %v442 = vld [vmem:[#allocation2 + $0x34] sm:$0xf]
    %v443 = vld [vmem:[#allocation2 + $0x38] sm:$0xf]
    %v444 = vld [vmem:[#allocation2 + $0x3c] sm:$0xf]
    %s445 = scalar_lea.vmem %s3, 1
    %v446 = vld [vmem:[%s445] sm:$0x1]
    %v448 = vlaneseq
    %v449 = vshrl.u32 %v448, 7
    %v450 = vsub.s32 0, %v449
    %v451 = vrot.slane %v446, %v450
    %v469 = vunpack.c.l.b16 %v429
    %v470 = vunpack.c.l.b16 %v430
    %v471 = vunpack.c.l.b16 %v431
    %v472 = vunpack.c.l.b16 %v432
    %v473 = vunpack.c.l.b16 %v433
    %v474 = vunpack.c.l.b16 %v434
    %v475 = vunpack.c.l.b16 %v435
    %v476 = vunpack.c.l.b16 %v436
    %v477 = vunpack.c.l.b16 %v437
    %v478 = vunpack.c.l.b16 %v438
    %v479 = vunpack.c.l.b16 %v439
    %v480 = vunpack.c.l.b16 %v440
    %v481 = vunpack.c.l.b16 %v441
    %v482 = vunpack.c.l.b16 %v442
    %v483 = vunpack.c.l.b16 %v443
    %v484 = vunpack.c.l.b16 %v444
    %v485 = vpack.c.b16 %v470, %v469
    %v486 = vpack.c.b16 %v472, %v471
    %v487 = vpack.c.b16 %v474, %v473
    %v488 = vpack.c.b16 %v476, %v475
    %v489 = vpack.c.b16 %v478, %v477
    %v490 = vpack.c.b16 %v480, %v479
    %v491 = vpack.c.b16 %v482, %v481
    %v492 = vpack.c.b16 %v484, %v483
    %501 = vmatprep.subr.bf16.mxu0 0
    %502 = vmatpush1.bf16.msra.mxu0 %v485
    %503 = vmatprep.subr.bf16.mxu0 0
    %504 = vmatpush1.bf16.msra.mxu0 %v486
    %505 = vmatprep.subr.bf16.mxu0 0
    %506 = vmatpush1.bf16.msra.mxu0 %v487
    %507 = vmatprep.subr.bf16.mxu0 0
    %508 = vmatpush1.bf16.msra.mxu0 %v488
    %509 = vmatprep.subr.bf16.mxu0 0
    %510 = vmatpush1.bf16.msra.mxu0 %v489
    %511 = vmatprep.subr.bf16.mxu0 0
    %512 = vmatpush1.bf16.msra.mxu0 %v490
    %513 = vmatprep.subr.bf16.mxu0 0
    %514 = vmatpush1.bf16.msra.mxu0 %v491
    %515 = vmatprep.subr.bf16.mxu0 0
    %516 = vmatpush1.bf16.msra.mxu0 %v492
    %517 = vmatprep.subr.bf16.mxu0 0
    %518 = vmatpush1.bf16.msra.mxu0 0
    %519 = vmatprep.subr.bf16.mxu0 0
    %520 = vmatpush1.bf16.msra.mxu0 0
    %521 = vmatprep.subr.bf16.mxu0 0
    %522 = vmatpush1.bf16.msra.mxu0 0
    %523 = vmatprep.subr.bf16.mxu0 0
    %524 = vmatpush1.bf16.msra.mxu0 0
    %525 = vmatprep.subr.bf16.mxu0 0
    %526 = vmatpush1.bf16.msra.mxu0 0
    %527 = vmatprep.subr.bf16.mxu0 0
    %528 = vmatpush1.bf16.msra.mxu0 0
    %529 = vmatprep.subr.bf16.mxu0 0
    %530 = vmatpush1.bf16.msra.mxu0 0
    %531 = vmatprep.subr.bf16.mxu0 0
    %532 = vmatpush1.bf16.msra.mxu0 0
    %533 = vmatprep.mubr.bf16.mxu0 0
    %534 = vmatmul.mubr.bf16.gmra.mrb[0].mxu0 %v421
    %v535 = vpop.f32.mrb[0].mxu0
    %v536 = vadd.f32 %v451, %v535
    %v537 = vpop.f32.mrb[0].mxu0
    %v538 = vpop.f32.mrb[0].mxu0
    %v539 = vadd.f32 %v451, %v538
    %v540 = vpop.f32.mrb[0].mxu0
    %541 = vmatprep.mubr.bf16.mxu0 0
    %542 = vmatmul.mubr.bf16.gmra.mrb[0].mxu0 %v422
    %v543 = vpop.f32.mrb[0].mxu0
    %v544 = vadd.f32 %v451, %v543
    %v545 = vpop.f32.mrb[0].mxu0
    %v546 = vpop.f32.mrb[0].mxu0
    %v547 = vadd.f32 %v451, %v546
    %v548 = vpop.f32.mrb[0].mxu0
    %549 = vmatprep.mubr.bf16.mxu0 0
    %550 = vmatmul.mubr.bf16.gmra.mrb[0].mxu0 %v423
    %v551 = vpop.f32.mrb[0].mxu0
    %v552 = vadd.f32 %v451, %v551
    %v553 = vpop.f32.mrb[0].mxu0
    %v554 = vpop.f32.mrb[0].mxu0
    %v555 = vadd.f32 %v451, %v554
    %v556 = vpop.f32.mrb[0].mxu0
    %557 = vmatprep.mubr.bf16.mxu0 0
    %558 = vmatmul.mubr.bf16.gmra.mrb[0].mxu0 %v424
    %v559 = vpop.f32.mrb[0].mxu0
    %v560 = vadd.f32 %v451, %v559
    %v561 = vpop.f32.mrb[0].mxu0
    %v562 = vpop.f32.mrb[0].mxu0
    %v563 = vadd.f32 %v451, %v562
    %v564 = vpop.f32.mrb[0].mxu0
    %565 = vmatprep.mubr.bf16.mxu0 0
    %566 = vmatmul.mubr.bf16.gmra.mrb[0].mxu0 %v425
    %v567 = vpop.f32.mrb[0].mxu0
    %v568 = vadd.f32 %v451, %v567
    %v569 = vpop.f32.mrb[0].mxu0
    %v570 = vpop.f32.mrb[0].mxu0
    %v571 = vadd.f32 %v451, %v570
    %v572 = vpop.f32.mrb[0].mxu0
    %573 = vmatprep.mubr.bf16.mxu0 0
    %574 = vmatmul.mubr.bf16.gmra.mrb[0].mxu0 %v426
    %v575 = vpop.f32.mrb[0].mxu0
    %v576 = vadd.f32 %v451, %v575
    %v577 = vpop.f32.mrb[0].mxu0
    %v578 = vpop.f32.mrb[0].mxu0
    %v579 = vadd.f32 %v451, %v578
    %v580 = vpop.f32.mrb[0].mxu0
    %581 = vmatprep.mubr.bf16.mxu0 0
    %582 = vmatmul.mubr.bf16.gmra.mrb[0].mxu0 %v427
    %v583 = vpop.f32.mrb[0].mxu0
    %v584 = vadd.f32 %v451, %v583
    %v585 = vpop.f32.mrb[0].mxu0
    %v586 = vpop.f32.mrb[0].mxu0
    %v587 = vadd.f32 %v451, %v586
    %v588 = vpop.f32.mrb[0].mxu0
    %589 = vmatprep.mubr.bf16.mxu0 0
    %590 = vmatmul.mubr.bf16.gmra.mrb[0].mxu0 %v428
    %v591 = vpop.f32.mrb[0].mxu0
    %v592 = vadd.f32 %v451, %v591
    %v593 = vpop.f32.mrb[0].mxu0
    %v594 = vpop.f32.mrb[0].mxu0
    %v595 = vadd.f32 %v451, %v594
    %v596 = vpop.f32.mrb[0].mxu0
    %597 = vdwg.mxu0
    %vm598 = vcmp.gt.f32.partialorder %v536, 0.0
    %vm599 = vcmp.gt.f32.partialorder %v539, 0.0
    %vm600 = vcmp.gt.f32.partialorder %v544, 0.0
    %vm601 = vcmp.gt.f32.partialorder %v547, 0.0
    %vm602 = vcmp.gt.f32.partialorder %v552, 0.0
    %vm603 = vcmp.gt.f32.partialorder %v555, 0.0
    %vm604 = vcmp.gt.f32.partialorder %v560, 0.0
    %vm605 = vcmp.gt.f32.partialorder %v563, 0.0
    %vm606 = vcmp.gt.f32.partialorder %v568, 0.0
    %vm607 = vcmp.gt.f32.partialorder %v571, 0.0
    %vm608 = vcmp.gt.f32.partialorder %v576, 0.0
    %vm609 = vcmp.gt.f32.partialorder %v579, 0.0
    %vm610 = vcmp.gt.f32.partialorder %v584, 0.0
    %vm611 = vcmp.gt.f32.partialorder %v587, 0.0
    %vm612 = vcmp.gt.f32.partialorder %v592, 0.0
    %vm613 = vcmp.gt.f32.partialorder %v595, 0.0
    %v614 = vmul.f32 %v536, 0.01
    %v615 = vmul.f32 %v539, 0.01
    %v616 = vmul.f32 %v544, 0.01
    %v617 = vmul.f32 %v547, 0.01
    %v618 = vmul.f32 %v552, 0.01
    %v619 = vmul.f32 %v555, 0.01
    %v620 = vmul.f32 %v560, 0.01
    %v621 = vmul.f32 %v563, 0.01
    %v622 = vmul.f32 %v568, 0.01
    %v623 = vmul.f32 %v571, 0.01
    %v624 = vmul.f32 %v576, 0.01
    %v625 = vmul.f32 %v579, 0.01
    %v626 = vmul.f32 %v584, 0.01
    %v627 = vmul.f32 %v587, 0.01
    %v628 = vmul.f32 %v592, 0.01
    %v629 = vmul.f32 %v595, 0.01
    %v630 = vsel %vm598, %v536, %v614
    %v631 = vsel %vm599, %v539, %v615
    %v632 = vsel %vm600, %v544, %v616
    %v633 = vsel %vm601, %v547, %v617
    %v634 = vsel %vm602, %v552, %v618
    %v635 = vsel %vm603, %v555, %v619
    %v636 = vsel %vm604, %v560, %v620
    %v637 = vsel %vm605, %v563, %v621
    %v638 = vsel %vm606, %v568, %v622
    %v639 = vsel %vm607, %v571, %v623
    %v640 = vsel %vm608, %v576, %v624
    %v641 = vsel %vm609, %v579, %v625
    %v642 = vsel %vm610, %v584, %v626
    %v643 = vsel %vm611, %v587, %v627
    %v644 = vsel %vm612, %v592, %v628
    %v645 = vsel %vm613, %v595, %v629
    %v646 = vpack.c.bf16 %v631, %v630
    %v647 = vpack.c.bf16 %v633, %v632
    %v648 = vpack.c.bf16 %v635, %v634
    %v649 = vpack.c.bf16 %v637, %v636
    %v650 = vpack.c.bf16 %v639, %v638
    %v651 = vpack.c.bf16 %v641, %v640
    %v652 = vpack.c.bf16 %v643, %v642
    %v653 = vpack.c.bf16 %v645, %v644
    %s654 = scalar_lea.vmem [#allocation2], 64
    %v655 = vld [vmem:[%s654] sm:$0xf]
    %v656 = vld [vmem:[%s654 + $0x4] sm:$0xf]
    %v657 = vld [vmem:[%s654 + $0x8] sm:$0xf]
    %v658 = vld [vmem:[%s654 + $0xc] sm:$0xf]
    %v659 = vld [vmem:[%s654 + $0x10] sm:$0xf]
    %v660 = vld [vmem:[%s654 + $0x14] sm:$0xf]
    %v661 = vld [vmem:[%s654 + $0x18] sm:$0xf]
    %v662 = vld [vmem:[%s654 + $0x1c] sm:$0xf]
    %v663 = vld [vmem:[%s654 + $0x20] sm:$0xf]
    %v664 = vld [vmem:[%s654 + $0x24] sm:$0xf]
    %v665 = vld [vmem:[%s654 + $0x28] sm:$0xf]
    %v666 = vld [vmem:[%s654 + $0x2c] sm:$0xf]
    %v667 = vld [vmem:[%s654 + $0x30] sm:$0xf]
    %v668 = vld [vmem:[%s654 + $0x34] sm:$0xf]
    %v669 = vld [vmem:[%s654 + $0x38] sm:$0xf]
    %v670 = vld [vmem:[%s654 + $0x3c] sm:$0xf]
    %s671 = scalar_lea.vmem %s3, 2
    %v672 = vld [vmem:[%s671] sm:$0x1]
    %v674 = vlaneseq
    %v675 = vshrl.u32 %v674, 7
    %v676 = vsub.s32 0, %v675
    %v677 = vrot.slane %v672, %v676
    %v695 = vunpack.c.l.b16 %v655
    %v696 = vunpack.c.l.b16 %v656
    %v697 = vunpack.c.l.b16 %v657
    %v698 = vunpack.c.l.b16 %v658
    %v699 = vunpack.c.l.b16 %v659
    %v700 = vunpack.c.l.b16 %v660
    %v701 = vunpack.c.l.b16 %v661
    %v702 = vunpack.c.l.b16 %v662
    %v703 = vunpack.c.l.b16 %v663
    %v704 = vunpack.c.l.b16 %v664
    %v705 = vunpack.c.l.b16 %v665
    %v706 = vunpack.c.l.b16 %v666
    %v707 = vunpack.c.l.b16 %v667
    %v708 = vunpack.c.l.b16 %v668
    %v709 = vunpack.c.l.b16 %v669
    %v710 = vunpack.c.l.b16 %v670
    %v711 = vpack.c.b16 %v696, %v695
    %v712 = vpack.c.b16 %v698, %v697
    %v713 = vpack.c.b16 %v700, %v699
    %v714 = vpack.c.b16 %v702, %v701
    %v715 = vpack.c.b16 %v704, %v703
    %v716 = vpack.c.b16 %v706, %v705
    %v717 = vpack.c.b16 %v708, %v707
    %v718 = vpack.c.b16 %v710, %v709
    %727 = vmatprep.subr.bf16.mxu0 0
    %728 = vmatpush1.bf16.msra.mxu0 %v711
    %729 = vmatprep.subr.bf16.mxu0 0
    %730 = vmatpush1.bf16.msra.mxu0 %v712
    %731 = vmatprep.subr.bf16.mxu0 0
    %732 = vmatpush1.bf16.msra.mxu0 %v713
    %733 = vmatprep.subr.bf16.mxu0 0
    %734 = vmatpush1.bf16.msra.mxu0 %v714
    %735 = vmatprep.subr.bf16.mxu0 0
    %736 = vmatpush1.bf16.msra.mxu0 %v715
    %737 = vmatprep.subr.bf16.mxu0 0
    %738 = vmatpush1.bf16.msra.mxu0 %v716
    %739 = vmatprep.subr.bf16.mxu0 0
    %740 = vmatpush1.bf16.msra.mxu0 %v717
    %741 = vmatprep.subr.bf16.mxu0 0
    %742 = vmatpush1.bf16.msra.mxu0 %v718
    %743 = vmatprep.subr.bf16.mxu0 0
    %744 = vmatpush1.bf16.msra.mxu0 0
    %745 = vmatprep.subr.bf16.mxu0 0
    %746 = vmatpush1.bf16.msra.mxu0 0
    %747 = vmatprep.subr.bf16.mxu0 0
    %748 = vmatpush1.bf16.msra.mxu0 0
    %749 = vmatprep.subr.bf16.mxu0 0
    %750 = vmatpush1.bf16.msra.mxu0 0
    %751 = vmatprep.subr.bf16.mxu0 0
    %752 = vmatpush1.bf16.msra.mxu0 0
    %753 = vmatprep.subr.bf16.mxu0 0
    %754 = vmatpush1.bf16.msra.mxu0 0
    %755 = vmatprep.subr.bf16.mxu0 0
    %756 = vmatpush1.bf16.msra.mxu0 0
    %757 = vmatprep.subr.bf16.mxu0 0
    %758 = vmatpush1.bf16.msra.mxu0 0
    %759 = vmatprep.mubr.bf16.mxu0 0
    %760 = vmatmul.mubr.bf16.gmra.mrb[0].mxu0 %v646
    %v761 = vpop.f32.mrb[0].mxu0
    %v762 = vadd.f32 %v677, %v761
    %v763 = vpop.f32.mrb[0].mxu0
    %v764 = vpop.f32.mrb[0].mxu0
    %v765 = vadd.f32 %v677, %v764
    %v766 = vpop.f32.mrb[0].mxu0
    %767 = vmatprep.mubr.bf16.mxu0 0
    %768 = vmatmul.mubr.bf16.gmra.mrb[0].mxu0 %v647
    %v769 = vpop.f32.mrb[0].mxu0
    %v770 = vadd.f32 %v677, %v769
    %v771 = vpop.f32.mrb[0].mxu0
    %v772 = vpop.f32.mrb[0].mxu0
    %v773 = vadd.f32 %v677, %v772
    %v774 = vpop.f32.mrb[0].mxu0
    %775 = vmatprep.mubr.bf16.mxu0 0
    %776 = vmatmul.mubr.bf16.gmra.mrb[0].mxu0 %v648
    %v777 = vpop.f32.mrb[0].mxu0
    %v778 = vadd.f32 %v677, %v777
    %v779 = vpop.f32.mrb[0].mxu0
    %v780 = vpop.f32.mrb[0].mxu0
    %v781 = vadd.f32 %v677, %v780
    %v782 = vpop.f32.mrb[0].mxu0
    %783 = vmatprep.mubr.bf16.mxu0 0
    %784 = vmatmul.mubr.bf16.gmra.mrb[0].mxu0 %v649
    %v785 = vpop.f32.mrb[0].mxu0
    %v786 = vadd.f32 %v677, %v785
    %v787 = vpop.f32.mrb[0].mxu0
    %v788 = vpop.f32.mrb[0].mxu0
    %v789 = vadd.f32 %v677, %v788
    %v790 = vpop.f32.mrb[0].mxu0
    %791 = vmatprep.mubr.bf16.mxu0 0
    %792 = vmatmul.mubr.bf16.gmra.mrb[0].mxu0 %v650
    %v793 = vpop.f32.mrb[0].mxu0
    %v794 = vadd.f32 %v677, %v793
    %v795 = vpop.f32.mrb[0].mxu0
    %v796 = vpop.f32.mrb[0].mxu0
    %v797 = vadd.f32 %v677, %v796
    %v798 = vpop.f32.mrb[0].mxu0
    %799 = vmatprep.mubr.bf16.mxu0 0
    %800 = vmatmul.mubr.bf16.gmra.mrb[0].mxu0 %v651
    %v801 = vpop.f32.mrb[0].mxu0
    %v802 = vadd.f32 %v677, %v801
    %v803 = vpop.f32.mrb[0].mxu0
    %v804 = vpop.f32.mrb[0].mxu0
    %v805 = vadd.f32 %v677, %v804
    %v806 = vpop.f32.mrb[0].mxu0
    %807 = vmatprep.mubr.bf16.mxu0 0
    %808 = vmatmul.mubr.bf16.gmra.mrb[0].mxu0 %v652
    %v809 = vpop.f32.mrb[0].mxu0
    %v810 = vadd.f32 %v677, %v809
    %v811 = vpop.f32.mrb[0].mxu0
    %v812 = vpop.f32.mrb[0].mxu0
    %v813 = vadd.f32 %v677, %v812
    %v814 = vpop.f32.mrb[0].mxu0
    %815 = vmatprep.mubr.bf16.mxu0 0
    %816 = vmatmul.mubr.bf16.gmra.mrb[0].mxu0 %v653
    %v817 = vpop.f32.mrb[0].mxu0
    %v818 = vadd.f32 %v677, %v817
    %v819 = vpop.f32.mrb[0].mxu0
    %v820 = vpop.f32.mrb[0].mxu0
    %v821 = vadd.f32 %v677, %v820
    %v822 = vpop.f32.mrb[0].mxu0
    %823 = vdwg.mxu0
    %vm824 = vcmp.gt.f32.partialorder %v762, 0.0
    %vm825 = vcmp.gt.f32.partialorder %v765, 0.0
    %vm826 = vcmp.gt.f32.partialorder %v770, 0.0
    %vm827 = vcmp.gt.f32.partialorder %v773, 0.0
    %vm828 = vcmp.gt.f32.partialorder %v778, 0.0
    %vm829 = vcmp.gt.f32.partialorder %v781, 0.0
    %vm830 = vcmp.gt.f32.partialorder %v786, 0.0
    %vm831 = vcmp.gt.f32.partialorder %v789, 0.0
    %vm832 = vcmp.gt.f32.partialorder %v794, 0.0
    %vm833 = vcmp.gt.f32.partialorder %v797, 0.0
    %vm834 = vcmp.gt.f32.partialorder %v802, 0.0
    %vm835 = vcmp.gt.f32.partialorder %v805, 0.0
    %vm836 = vcmp.gt.f32.partialorder %v810, 0.0
    %vm837 = vcmp.gt.f32.partialorder %v813, 0.0
    %vm838 = vcmp.gt.f32.partialorder %v818, 0.0
    %vm839 = vcmp.gt.f32.partialorder %v821, 0.0
    %v840 = vmul.f32 %v762, 0.01
    %v841 = vmul.f32 %v765, 0.01
    %v842 = vmul.f32 %v770, 0.01
    %v843 = vmul.f32 %v773, 0.01
    %v844 = vmul.f32 %v778, 0.01
    %v845 = vmul.f32 %v781, 0.01
    %v846 = vmul.f32 %v786, 0.01
    %v847 = vmul.f32 %v789, 0.01
    %v848 = vmul.f32 %v794, 0.01
    %v849 = vmul.f32 %v797, 0.01
    %v850 = vmul.f32 %v802, 0.01
    %v851 = vmul.f32 %v805, 0.01
    %v852 = vmul.f32 %v810, 0.01
    %v853 = vmul.f32 %v813, 0.01
    %v854 = vmul.f32 %v818, 0.01
    %v855 = vmul.f32 %v821, 0.01
    %v856 = vsel %vm824, %v762, %v840
    %v857 = vsel %vm825, %v765, %v841
    %v858 = vsel %vm826, %v770, %v842
    %v859 = vsel %vm827, %v773, %v843
    %v860 = vsel %vm828, %v778, %v844
    %v861 = vsel %vm829, %v781, %v845
    %v862 = vsel %vm830, %v786, %v846
    %v863 = vsel %vm831, %v789, %v847
    %v864 = vsel %vm832, %v794, %v848
    %v865 = vsel %vm833, %v797, %v849
    %v866 = vsel %vm834, %v802, %v850
    %v867 = vsel %vm835, %v805, %v851
    %v868 = vsel %vm836, %v810, %v852
    %v869 = vsel %vm837, %v813, %v853
    %v870 = vsel %vm838, %v818, %v854
    %v871 = vsel %vm839, %v821, %v855
    %v872 = vpack.c.bf16 %v857, %v856
    %v873 = vpack.c.bf16 %v859, %v858
    %v874 = vpack.c.bf16 %v861, %v860
    %v875 = vpack.c.bf16 %v863, %v862
    %v876 = vpack.c.bf16 %v865, %v864
    %v877 = vpack.c.bf16 %v867, %v866
    %v878 = vpack.c.bf16 %v869, %v868
    %v879 = vpack.c.bf16 %v871, %v870
    %s880 = scalar_lea.vmem [#allocation2], 128
    %v881 = vld [vmem:[%s880] sm:$0xf]
    %v882 = vld [vmem:[%s880 + $0x4] sm:$0xf]
    %v883 = vld [vmem:[%s880 + $0x8] sm:$0xf]
    %v884 = vld [vmem:[%s880 + $0xc] sm:$0xf]
    %v885 = vld [vmem:[%s880 + $0x10] sm:$0xf]
    %v886 = vld [vmem:[%s880 + $0x14] sm:$0xf]
    %v887 = vld [vmem:[%s880 + $0x18] sm:$0xf]
    %v888 = vld [vmem:[%s880 + $0x1c] sm:$0xf]
    %v889 = vld [vmem:[%s880 + $0x20] sm:$0xf]
    %v890 = vld [vmem:[%s880 + $0x24] sm:$0xf]
    %v891 = vld [vmem:[%s880 + $0x28] sm:$0xf]
    %v892 = vld [vmem:[%s880 + $0x2c] sm:$0xf]
    %v893 = vld [vmem:[%s880 + $0x30] sm:$0xf]
    %v894 = vld [vmem:[%s880 + $0x34] sm:$0xf]
    %v895 = vld [vmem:[%s880 + $0x38] sm:$0xf]
    %v896 = vld [vmem:[%s880 + $0x3c] sm:$0xf]
    %s897 = scalar_lea.vmem %s3, 3
    %v898 = vld [vmem:[%s897] sm:$0x1]
    %v900 = vlaneseq
    %v901 = vshrl.u32 %v900, 7
    %v902 = vsub.s32 0, %v901
    %v903 = vrot.slane %v898, %v902
    %v921 = vunpack.c.l.b16 %v881
    %v922 = vunpack.c.l.b16 %v882
    %v923 = vunpack.c.l.b16 %v883
    %v924 = vunpack.c.l.b16 %v884
    %v925 = vunpack.c.l.b16 %v885
    %v926 = vunpack.c.l.b16 %v886
    %v927 = vunpack.c.l.b16 %v887
    %v928 = vunpack.c.l.b16 %v888
    %v929 = vunpack.c.l.b16 %v889
    %v930 = vunpack.c.l.b16 %v890
    %v931 = vunpack.c.l.b16 %v891
    %v932 = vunpack.c.l.b16 %v892
    %v933 = vunpack.c.l.b16 %v893
    %v934 = vunpack.c.l.b16 %v894
    %v935 = vunpack.c.l.b16 %v895
    %v936 = vunpack.c.l.b16 %v896
    %v937 = vpack.c.b16 %v922, %v921
    %v938 = vpack.c.b16 %v924, %v923
    %v939 = vpack.c.b16 %v926, %v925
    %v940 = vpack.c.b16 %v928, %v927
    %v941 = vpack.c.b16 %v930, %v929
    %v942 = vpack.c.b16 %v932, %v931
    %v943 = vpack.c.b16 %v934, %v933
    %v944 = vpack.c.b16 %v936, %v935
    %953 = vmatprep.subr.bf16.mxu0 0
    %954 = vmatpush1.bf16.msra.mxu0 %v937
    %955 = vmatprep.subr.bf16.mxu0 0
    %956 = vmatpush1.bf16.msra.mxu0 %v938
    %957 = vmatprep.subr.bf16.mxu0 0
    %958 = vmatpush1.bf16.msra.mxu0 %v939
    %959 = vmatprep.subr.bf16.mxu0 0
    %960 = vmatpush1.bf16.msra.mxu0 %v940
    %961 = vmatprep.subr.bf16.mxu0 0
    %962 = vmatpush1.bf16.msra.mxu0 %v941
    %963 = vmatprep.subr.bf16.mxu0 0
    %964 = vmatpush1.bf16.msra.mxu0 %v942
    %965 = vmatprep.subr.bf16.mxu0 0
    %966 = vmatpush1.bf16.msra.mxu0 %v943
    %967 = vmatprep.subr.bf16.mxu0 0
    %968 = vmatpush1.bf16.msra.mxu0 %v944
    %969 = vmatprep.subr.bf16.mxu0 0
    %970 = vmatpush1.bf16.msra.mxu0 0
    %971 = vmatprep.subr.bf16.mxu0 0
    %972 = vmatpush1.bf16.msra.mxu0 0
    %973 = vmatprep.subr.bf16.mxu0 0
    %974 = vmatpush1.bf16.msra.mxu0 0
    %975 = vmatprep.subr.bf16.mxu0 0
    %976 = vmatpush1.bf16.msra.mxu0 0
    %977 = vmatprep.subr.bf16.mxu0 0
    %978 = vmatpush1.bf16.msra.mxu0 0
    %979 = vmatprep.subr.bf16.mxu0 0
    %980 = vmatpush1.bf16.msra.mxu0 0
    %981 = vmatprep.subr.bf16.mxu0 0
    %982 = vmatpush1.bf16.msra.mxu0 0
    %983 = vmatprep.subr.bf16.mxu0 0
    %984 = vmatpush1.bf16.msra.mxu0 0
    %985 = vmatprep.mubr.bf16.mxu0 0
    %986 = vmatmul.mubr.bf16.gmra.mrb[0].mxu0 %v872
    %v987 = vpop.f32.mrb[0].mxu0
    %v988 = vadd.f32 %v903, %v987
    %v989 = vpop.f32.mrb[0].mxu0
    %v990 = vpop.f32.mrb[0].mxu0
    %v991 = vadd.f32 %v903, %v990
    %v992 = vpop.f32.mrb[0].mxu0
    %993 = vmatprep.mubr.bf16.mxu0 0
    %994 = vmatmul.mubr.bf16.gmra.mrb[0].mxu0 %v873
    %v995 = vpop.f32.mrb[0].mxu0
    %v996 = vadd.f32 %v903, %v995
    %v997 = vpop.f32.mrb[0].mxu0
    %v998 = vpop.f32.mrb[0].mxu0
    %v999 = vadd.f32 %v903, %v998
    %v1000 = vpop.f32.mrb[0].mxu0
    %1001 = vmatprep.mubr.bf16.mxu0 0
    %1002 = vmatmul.mubr.bf16.gmra.mrb[0].mxu0 %v874
    %v1003 = vpop.f32.mrb[0].mxu0
    %v1004 = vadd.f32 %v903, %v1003
    %v1005 = vpop.f32.mrb[0].mxu0
    %v1006 = vpop.f32.mrb[0].mxu0
    %v1007 = vadd.f32 %v903, %v1006
    %v1008 = vpop.f32.mrb[0].mxu0
    %1009 = vmatprep.mubr.bf16.mxu0 0
    %1010 = vmatmul.mubr.bf16.gmra.mrb[0].mxu0 %v875
    %v1011 = vpop.f32.mrb[0].mxu0
    %v1012 = vadd.f32 %v903, %v1011
    %v1013 = vpop.f32.mrb[0].mxu0
    %v1014 = vpop.f32.mrb[0].mxu0
    %v1015 = vadd.f32 %v903, %v1014
    %v1016 = vpop.f32.mrb[0].mxu0
    %1017 = vmatprep.mubr.bf16.mxu0 0
    %1018 = vmatmul.mubr.bf16.gmra.mrb[0].mxu0 %v876
    %v1019 = vpop.f32.mrb[0].mxu0
    %v1020 = vadd.f32 %v903, %v1019
    %v1021 = vpop.f32.mrb[0].mxu0
    %v1022 = vpop.f32.mrb[0].mxu0
    %v1023 = vadd.f32 %v903, %v1022
    %v1024 = vpop.f32.mrb[0].mxu0
    %1025 = vmatprep.mubr.bf16.mxu0 0
    %1026 = vmatmul.mubr.bf16.gmra.mrb[0].mxu0 %v877
    %v1027 = vpop.f32.mrb[0].mxu0
    %v1028 = vadd.f32 %v903, %v1027
    %v1029 = vpop.f32.mrb[0].mxu0
    %v1030 = vpop.f32.mrb[0].mxu0
    %v1031 = vadd.f32 %v903, %v1030
    %v1032 = vpop.f32.mrb[0].mxu0
    %1033 = vmatprep.mubr.bf16.mxu0 0
    %1034 = vmatmul.mubr.bf16.gmra.mrb[0].mxu0 %v878
    %v1035 = vpop.f32.mrb[0].mxu0
    %v1036 = vadd.f32 %v903, %v1035
    %v1037 = vpop.f32.mrb[0].mxu0
    %v1038 = vpop.f32.mrb[0].mxu0
    %v1039 = vadd.f32 %v903, %v1038
    %v1040 = vpop.f32.mrb[0].mxu0
    %1041 = vmatprep.mubr.bf16.mxu0 0
    %1042 = vmatmul.mubr.bf16.gmra.mrb[0].mxu0 %v879
    %v1043 = vpop.f32.mrb[0].mxu0
    %v1044 = vadd.f32 %v903, %v1043
    %v1045 = vpop.f32.mrb[0].mxu0
    %v1046 = vpop.f32.mrb[0].mxu0
    %v1047 = vadd.f32 %v903, %v1046
    %v1048 = vpop.f32.mrb[0].mxu0
    %1049 = vdwg.mxu0
    %1050 = vxpose.xlu0.b32.start [1/16] %v988, 128
    %1051 = vxpose.xlu0.b32.cont [2/16] %v991, 128
    %1052 = vxpose.xlu0.b32.cont [3/16] %v996, 128
    %1053 = vxpose.xlu0.b32.cont [4/16] %v999, 128
    %1054 = vxpose.xlu0.b32.cont [5/16] %v1004, 128
    %1055 = vxpose.xlu0.b32.cont [6/16] %v1007, 128
    %1056 = vxpose.xlu0.b32.cont [7/16] %v1012, 128
    %1057 = vxpose.xlu0.b32.cont [8/16] %v1015, 128
    %1058 = vxpose.xlu0.b32.cont [9/16] %v1020, 128
    %1059 = vxpose.xlu0.b32.cont [10/16] %v1023, 128
    %1060 = vxpose.xlu0.b32.cont [11/16] %v1028, 128
    %1061 = vxpose.xlu0.b32.cont [12/16] %v1031, 128
    %1062 = vxpose.xlu0.b32.cont [13/16] %v1036, 128
    %1063 = vxpose.xlu0.b32.cont [14/16] %v1039, 128
    %1064 = vxpose.xlu0.b32.cont [15/16] %v1044, 128
    %1065 = vxpose.xlu0.b32.end [16/16] %v1047, 128
    %v1066 = vpop.trf.xlu0
    %v1067 = vpop.trf.xlu0
    %v1068 = vpop.trf.xlu0
    %v1069 = vpop.trf.xlu0
    %v1070 = vpop.trf.xlu0
    %v1071 = vpop.trf.xlu0
    %v1072 = vpop.trf.xlu0
    %v1073 = vpop.trf.xlu0
    %v1074 = vpop.trf.xlu0
    %v1075 = vpop.trf.xlu0
    %v1076 = vpop.trf.xlu0
    %v1077 = vpop.trf.xlu0
    %v1078 = vpop.trf.xlu0
    %v1079 = vpop.trf.xlu0
    %v1080 = vpop.trf.xlu0
    %v1081 = vpop.trf.xlu0
    %1082 = vst [vmem:[#allocation5] sm:$0x1] %v1066
    // Predicated region
    $region22: #{tpu_custom_call.1} parent=1 // pred_check
      _
    $region23: #{tpu_custom_call.1} parent=1 // pred_check_branch
      %1084 = sbr.rel (0) target = $region25
    $region24: #{tpu_custom_call.1} parent=1 // pred_region
      %s1086 = ssub.s32 16, 16
      %1087 = vsyncadd [#allocation4], %s1086
      %s1089 = sshll.u32 [#allocation5], 4
      %s1090 = int_to_ptr.vmem [resolvable:$true] %s1089
      %1092 = dma.vmem_to_hbm [thread:$0]  %s1090, 16, %s4, [#allocation4]
    $region25: #{tpu_custom_call.1} parent=1 // pred_fallthru
      _
    // Predicated region
    $region26: #{tpu_custom_call.1} parent=1 // pred_check
      _
    $region27: #{tpu_custom_call.1} parent=1 // pred_check_branch
      %1094 = sbr.rel (0) target = $region29
    $region28: #{tpu_custom_call.1} parent=1 // pred_region
      %1095 = dma.done [#allocation4], 16
    $region29: #{tpu_custom_call.1} parent=1 // pred_fallthru
      _
    %1096 = vsyncpa [#allocation3], 1
    %1097 = vsyncpa [#allocation4], 1

</llo_original>
